<compile_context>
chip_gen: v6e
topology: v6e:2x2x1
jax: 0.10.0
libtpu: 0.0.40
codegen_flags: <defaults>
</compile_context>

<pallas_src>
import numpy as np
import jax
import jax.numpy as jnp
from jax import lax
from jax.experimental import pallas as pl
from jax.experimental.pallas import tpu as pltpu


TU_TILE = 16      # Tu tile per grid step (multiple of 16: bf16 sublane packing)
LANE = 128        # TPU lane width


def _round_up(x, m):
    return ((x + m - 1) // m) * m


# ----------------------------------------------------------------------------
# Kernel 1: time-window max pooling + per-chunk channel [sum, sum_sq]
# grid = (B, Tu_pad // TU_TILE); both axes "parallel" (no resident accumulator)
# ----------------------------------------------------------------------------
def _pool_kernel(tw_ref, uniq_ref, x_ref, hid_ref, stats_ref):
    # tw_ref:   (1, T, 1)        float32 window ids, NaN at masked steps
    # uniq_ref: (1, TU_TILE, 1)  float32 window ids of this chunk, -99 padding
    # x_ref:    (1, T, Cp)       float32 features, lane-padded to Cp
    # hid_ref:  (1, TU_TILE, Cp) pooled output (f32 or bf16)
    # stats_ref:(1, 2, Cp)       this chunk's [sum, sum_sq] over TU_TILE rows
    tw = tw_ref[0]                                   # (T, 1)
    u = uniq_ref[0]                                  # (TU_TILE, 1)
    x = x_ref[0]                                     # (T, Cp)
    # Window membership: NaN (masked steps) and -99 padding never match.
    same = tw[:, None, :] == u[None, :, :]           # (T, TU_TILE, 1)
    # 0.0 fill + max over T == torch.where(mask, x, zero).amax(dim=1)
    masked = jnp.where(same, x[:, None, :], 0.0)     # (T, TU_TILE, Cp)
    h = jnp.max(masked, axis=0)                      # (TU_TILE, Cp) f32
    hid_ref[0, :, :] = h.astype(hid_ref.dtype)
    stats_ref[0, 0:1, :] = jnp.sum(h, axis=0, keepdims=True)
    stats_ref[0, 1:2, :] = jnp.sum(h * h, axis=0, keepdims=True)


# ----------------------------------------------------------------------------
# Kernel 2: fused (BN-affine o conv1x1 o fc) == one matmul + bias
# ----------------------------------------------------------------------------
def _head_kernel(h_ref, w_ref, b_ref, o_ref):
    # Standard layout (M >= 64): o (RT, Mp) = h (RT, Cp) @ w (Cp, Mp) + b
    o_ref[...] = (jnp.dot(h_ref[...], w_ref[...],
                          preferred_element_type=jnp.float32)
                  + b_ref[...]).astype(o_ref.dtype)


def _head_t_kernel(h_ref, w_ref, b_ref, o_ref):
    # Transposed layout for small M: o (Mp8, RT) = w (Mp8, Cp) . h(RT, Cp)^T + b
    acc = lax.dot_general(w_ref[...], h_ref[...],
                          dimension_numbers=(((1,), (1,)), ((), ())),
                          preferred_element_type=jnp.float32)
    o_ref[...] = (acc + b_ref[...]).astype(o_ref.dtype)


# ----------------------------------------------------------------------------
# Wrapper
# ----------------------------------------------------------------------------
def aggr_encoder_forward(x, mask, params, eps=1e-5, head_dtype=jnp.bfloat16):
    x = jnp.asarray(x, jnp.float32)
    mask = jnp.asarray(mask, bool)
    B, T, _ = x.shape
    tw = x[..., 0:1]                                  # (B, T, 1)
    feat = x[..., 1:]                                 # (B, T, C)
    C = feat.shape[-1]
    Cp = _round_up(C, LANE)                           # lane-dense feature dim
    if Cp != C:
        feat = jnp.pad(feat, ((0, 0), (0, 0), (0, Cp - C)))

    # ---- on-device tw_uniq construction -------------------------------------
    tw_nan = jnp.where(mask, tw, jnp.nan)             # (B, T, 1)
    tw_min = jnp.nanmin(tw_nan, axis=1)[:, 0]         # (B,)
    tw_max = jnp.nanmax(tw_nan, axis=1)[:, 0]         # (B,)
    span = tw_max - tw_min + 1.0                      # (B,)
    # Output length is data dependent (like the PyTorch module): one scalar
    # sync, then bucketed to a multiple of TU_TILE to bound recompiles.
    Tu = int(jax.device_get(jnp.max(span)))
    Tu = max(Tu, 1)
    Tu_pad = _round_up(Tu, TU_TILE)
    idx = jnp.arange(Tu_pad, dtype=jnp.float32)
    uniq = tw_min[:, None] + idx[None, :]             # (B, Tu_pad)
    uniq = jnp.where(idx[None, :] < span[:, None], uniq, -99.0)
    uniq = uniq[:, :, None]                           # (B, Tu_pad, 1)

    # ---- kernel 1: masked time-window max pooling + per-chunk BN stats ------
    n_tu = Tu_pad // TU_TILE
    cparams = {"dimension_semantics": ("parallel", "parallel")}
    # v7x has only 32 MiB scoped VMEM default (64 MiB physical): raise the
    # limit only when the resident per-batch (T, Cp) blocks actually need it.
    # TODO(synk): for very long sequences also tile T (extra grid axis) instead
    # of keeping the full (T, Cp) block resident.
    vmem_est = 4 * (2 * (T * Cp + T * LANE + TU_TILE * LANE
                         + TU_TILE * Cp + 2 * Cp)
                    + T * TU_TILE * Cp)
    if vmem_est > (8 << 20):
        cparams["vmem_limit_bytes"] = int(min(vmem_est + (8 << 20), 64 << 20))

    hidden, stats = pl.pallas_call(
        _pool_kernel,
        out_shape=(jax.ShapeDtypeStruct((B, Tu_pad, Cp), head_dtype),
                   jax.ShapeDtypeStruct((B * n_tu, 2, Cp), jnp.float32)),
        grid=(B, n_tu),
        in_specs=[pl.BlockSpec((1, T, 1), lambda b, j: (b, 0, 0)),
                  pl.BlockSpec((1, TU_TILE, 1), lambda b, j: (b, j, 0)),
                  pl.BlockSpec((1, T, Cp), lambda b, j: (b, 0, 0))],
        out_specs=(pl.BlockSpec((1, TU_TILE, Cp), lambda b, j: (b, j, 0)),
                   pl.BlockSpec((1, 2, Cp),
                                lambda b, j: (b * n_tu + j, 0, 0))),
        compiler_params=pltpu.CompilerParams(**cparams),
    )(tw_nan, uniq, feat)

    # ---- fold BN(training stats) + Conv1d(k=1) + Linear into ONE affine -----
    # Padded windows are all-zero rows -> contribute 0 to sum / sum_sq, so
    # dividing by the true B*Tu reproduces the reference statistics exactly.
    n = float(B * Tu)
    stats_sum = jnp.sum(stats, axis=0)[:, :C]                  # (2, C)
    mean = stats_sum[0] / n
    var = stats_sum[1] / n - mean * mean                        # biased var
    eff_scale = params["bn_gamma"] / jnp.sqrt(var + eps)        # (C,)
    eff_shift = params["bn_beta"] - mean * eff_scale            # (C,)

    C_out = params["conv_w"].shape[0]
    M = params["fc_w"].shape[0]
    wc = params["conv_w"].reshape(C_out, C)                     # (C_out, C)
    wcf = wc.T @ params["fc_w"].T                               # (C, M)
    w_all = eff_scale[:, None] * wcf                            # (C, M)
    b_all = (eff_shift @ wcf
             + params["conv_b"] @ params["fc_w"].T
             + params["fc_b"])                                  # (M,)

    # ---- kernel 2: flattened (B*Tu_pad) rows, one fused matmul per row tile -
    rows = B * Tu_pad
    h_flat = hidden.reshape(rows, Cp)                           # head_dtype
    if rows >= 512:
        RT = 512
    elif rows >= 128:
        RT = 128
    else:
        RT = _round_up(rows, 8)
    rows_pad = _round_up(rows, RT)
    if rows_pad != rows:
        h_flat = jnp.pad(h_flat, ((0, rows_pad - rows), (0, 0)))

    if M < 64:
        # Transposed head: rows on the lane axis (lane-dense, unmasked stores)
        # while M is padded only to a multiple of 8 sublanes -> minimal output
        # HBM traffic for tiny M (e.g. M=4 writes 8 words/row, not 128).
        Mp8 = _round_up(M, 8)
        w_t = jnp.zeros((Mp8, Cp), jnp.float32).at[:M, :C].set(w_all.T)
        b_t = jnp.zeros((Mp8, 1), jnp.float32).at[:M, 0].set(b_all)
        out_t = pl.pallas_call(
            _head_t_kernel,
            out_shape=jax.ShapeDtypeStruct((Mp8, rows_pad), jnp.float32),
            grid=(rows_pad // RT,),
            in_specs=[pl.BlockSpec((RT, Cp), lambda i: (i, 0)),
                      pl.BlockSpec((Mp8, Cp), lambda i: (0, 0)),
                      pl.BlockSpec((Mp8, 1), lambda i: (0, 0))],
            out_specs=pl.BlockSpec((Mp8, RT), lambda i: (0, i)),
            compiler_params=pltpu.CompilerParams(
                dimension_semantics=("parallel",)),
        )(h_flat, w_t.astype(head_dtype), b_t)
        out = out_t[:M, :rows].T                                # (rows, M)
    else:
        # Lane-padded output dim -> unmasked stores when M is already large.
        Mp = _round_up(M, LANE)
        w_pad = jnp.zeros((Cp, Mp), jnp.float32).at[:C, :M].set(w_all)
        b_pad = jnp.zeros((1, Mp), jnp.float32).at[:, :M].set(b_all)
        out_f = pl.pallas_call(
            _head_kernel,
            out_shape=jax.ShapeDtypeStruct((rows_pad, Mp), jnp.float32),
            grid=(rows_pad // RT,),
            in_specs=[pl.BlockSpec((RT, Cp), lambda i: (i, 0)),
                      pl.BlockSpec((Cp, Mp), lambda i: (0, 0)),
                      pl.BlockSpec((1, Mp), lambda i: (0, 0))],
            out_specs=pl.BlockSpec((RT, Mp), lambda i: (i, 0)),
            compiler_params=pltpu.CompilerParams(
                dimension_semantics=("parallel",)),
        )(h_flat, w_pad.astype(head_dtype), b_pad)
        out = out_f[:rows, :M]                                  # (rows, M)

    return out.reshape(B, Tu_pad, M)[:, :Tu, :]


# ----------------------------------------------------------------------------
# Pure NumPy reference (mirrors the PyTorch forward, training-mode BN)
# ----------------------------------------------------------------------------
def reference_forward(x, mask, params, eps=1e-5):
    x = np.asarray(x, np.float32)
    mask = np.asarray(mask, bool)
    tw = x[..., 0:1]
    feat = x[..., 1:]
    tw_nan = np.where(mask, tw, np.nan)
    tw_max = np.nanmax(tw_nan, axis=1).squeeze(-1)
    tw_min = np.nanmin(tw_nan, axis=1).squeeze(-1)
    ranges = [np.arange(mi, ma + 1, dtype=np.float32)
              for mi, ma in zip(tw_min, tw_max)]
    Tu = max(len(r) for r in ranges)
    tw_uniq = np.full((len(ranges), Tu), -99.0, np.float32)
    for b, r in enumerate(ranges):
        tw_uniq[b, :len(r)] = r
    same = (tw_nan >= tw_uniq[:, None, :]) & (tw_nan <= tw_uniq[:, None, :])
    masked = np.where(same[..., None], feat[:, :, None, :], 0.0)   # (B,T,Tu,C)
    hidden = masked.max(axis=1)                                    # (B,Tu,C)

    C = hidden.shape[-1]
    flat = hidden.reshape(-1, C)
    mean = flat.mean(0)
    var = flat.var(0)                                              # biased
    gamma = np.asarray(params["bn_gamma"])
    beta = np.asarray(params["bn_beta"])
    hn = (hidden - mean) / np.sqrt(var + eps) * gamma + beta

    cw = np.asarray(params["conv_w"]).reshape(params["conv_w"].shape[0], C)
    cb = np.asarray(params["conv_b"])
    fw = np.asarray(params["fc_w"])
    fb = np.asarray(params["fc_b"])
    z = hn @ cw.T + cb
    y = z @ fw.T + fb
    return y


if __name__ == "__main__":
    B, T, dim_in, dim_out, M = 2, 8, 8, 16, 4

    key = jax.random.PRNGKey(0)
    k1, k2, k3, k4, k5, k6 = jax.random.split(key, 6)

    # time-window ids are small non-negative integers stored as float32
    tw = jnp.floor(jax.random.uniform(k1, (B, T, 1), minval=0.0, maxval=5.0))
    feats = jax.random.normal(k2, (B, T, dim_in), dtype=jnp.float32)
    x = jnp.concatenate([tw.astype(jnp.float32), feats], axis=-1)  # (B,T,1+C)
    mask = jax.random.uniform(k3, (B, T, 1)) < 0.8
    mask = mask.at[:, 0, :].set(True)   # at least one valid step per sequence

    params = {
        "bn_gamma": jnp.ones((dim_in,), jnp.float32),
        "bn_beta": jnp.zeros((dim_in,), jnp.float32),
        "conv_w": 0.1 * jax.random.normal(k4, (dim_out, dim_in, 1),
                                          dtype=jnp.float32),
        "conv_b": 0.1 * jax.random.normal(k5, (dim_out,), dtype=jnp.float32),
        "fc_w": 0.1 * jax.random.normal(k6, (M, dim_out), dtype=jnp.float32),
        "fc_b": jnp.linspace(-0.1, 0.1, M, dtype=jnp.float32),
    }

    ref = reference_forward(x, mask, params)

    # 1) f32 head path: strict check of the kernel math against the reference.
    out_f32 = jax.block_until_ready(
        aggr_encoder_forward(x, mask, params, head_dtype=jnp.float32))
    np.testing.assert_allclose(np.asarray(out_f32), ref, rtol=2e-4, atol=2e-4)

    # 2) default bf16 hidden/weights (MXU-native, halves the hidden HBM round
    #    trip) with f32 accumulation: relaxed tolerance for the bf16 rounding.
    out_bf16 = jax.block_until_ready(aggr_encoder_forward(x, mask, params))
    np.testing.assert_allclose(np.asarray(out_bf16), ref, rtol=2e-2, atol=2e-2)

    print("KERNEL_OK")
</pallas_src>

<mosaic_0001>
module attributes {stable_mosaic.version = 11 : i64} {
  func.func @_pool_kernel(%arg0: i32, %arg1: i32, %arg2: memref<1x8x1xf32, #tpu.memory_space<vmem>>, %arg3: memref<1x16x1xf32, #tpu.memory_space<vmem>>, %arg4: memref<1x8x128xf32, #tpu.memory_space<vmem>>, %arg5: memref<1x16x128xf32, #tpu.memory_space<vmem>>, %arg6: memref<1x2x128xf32, #tpu.memory_space<vmem>>) attributes {dimension_semantics = [#tpu.dimension_semantics<parallel>, #tpu.dimension_semantics<parallel>], iteration_bounds = array<i64: 2, 1>, scalar_prefetch = 0 : i64, scratch_operands = 0 : i64, tpu.core_type = #tpu.core_type<tc>, window_params = [{transform_indices = @transform_0, window_bounds = array<i64: 1, 8, 1>}, {transform_indices = @transform_1, window_bounds = array<i64: 1, 16, 1>}, {transform_indices = @transform_2, window_bounds = array<i64: 1, 8, 128>}, {transform_indices = @transform_3, window_bounds = array<i64: 1, 16, 128>}, {transform_indices = @transform_4, window_bounds = array<i64: 1, 2, 128>}]} {
    %c0 = arith.constant 0 : index
    %c0_0 = arith.constant 0 : index
    %c0_1 = arith.constant 0 : index
    %0 = vector.load %arg2[%c0, %c0_0, %c0_1] : memref<1x8x1xf32, #tpu.memory_space<vmem>>, vector<1x8x1xf32>
    %1 = vector.shape_cast %0 : vector<1x8x1xf32> to vector<8x1xf32>
    %c0_2 = arith.constant 0 : index
    %c0_3 = arith.constant 0 : index
    %c0_4 = arith.constant 0 : index
    %2 = vector.load %arg3[%c0_2, %c0_3, %c0_4] : memref<1x16x1xf32, #tpu.memory_space<vmem>>, vector<1x16x1xf32>
    %3 = vector.shape_cast %2 : vector<1x16x1xf32> to vector<16x1xf32>
    %c0_5 = arith.constant 0 : index
    %c0_6 = arith.constant 0 : index
    %c0_7 = arith.constant 0 : index
    %4 = vector.load %arg4[%c0_5, %c0_6, %c0_7] : memref<1x8x128xf32, #tpu.memory_space<vmem>>, vector<1x8x128xf32>
    %5 = vector.shape_cast %4 : vector<1x8x128xf32> to vector<8x128xf32>
    %6 = vector.shape_cast %1 : vector<8x1xf32> to vector<8x1x1xf32>
    %7 = vector.shape_cast %3 : vector<16x1xf32> to vector<1x16x1xf32>
    %8 = vector.broadcast %6 : vector<8x1x1xf32> to vector<8x16x1xf32>
    %9 = vector.broadcast %7 : vector<1x16x1xf32> to vector<8x16x1xf32>
    %10 = arith.cmpf oeq, %8, %9 : vector<8x16x1xf32>
    %11 = vector.shape_cast %5 : vector<8x128xf32> to vector<8x1x128xf32>
    %cst = arith.constant 0.000000e+00 : f32
    %12 = vector.shape_cast %10 : vector<8x16x1xi1> to vector<8x16x1xi1>
    %13 = vector.broadcast %12 : vector<8x16x1xi1> to vector<8x16x128xi1>
    %14 = vector.shape_cast %11 : vector<8x1x128xf32> to vector<8x1x128xf32>
    %15 = vector.broadcast %14 : vector<8x1x128xf32> to vector<8x16x128xf32>
    %16 = vector.broadcast %cst : f32 to vector<8x16x128xf32>
    %17 = arith.select %13, %15, %16 : vector<8x16x128xi1>, vector<8x16x128xf32>
    %cst_8 = arith.constant dense<0xFF800000> : vector<16x128xf32>
    %18 = vector.multi_reduction <maximumf>, %17, %cst_8 [0] : vector<8x16x128xf32> to vector<16x128xf32>
    %c0_9 = arith.constant 0 : index
    %c0_10 = arith.constant 0 : index
    %c0_11 = arith.constant 0 : index
    %19 = vector.load %arg5[%c0_9, %c0_10, %c0_11] : memref<1x16x128xf32, #tpu.memory_space<vmem>>, vector<1x16x128xf32>
    %20 = vector.shape_cast %19 : vector<1x16x128xf32> to vector<16x128xf32>
    %21 = vector.shape_cast %18 : vector<16x128xf32> to vector<1x16x128xf32>
    tpu.vector_store %arg5[%c0_9, %c0_10, %c0_11], %21 {strides = array<i32>} : memref<1x16x128xf32, #tpu.memory_space<vmem>>, vector<1x16x128xf32>,
    %cst_12 = arith.constant dense<0.000000e+00> : vector<128xf32>
    %22 = vector.multi_reduction <add>, %18, %cst_12 [0] : vector<16x128xf32> to vector<128xf32>
    %23 = vector.shape_cast %22 : vector<128xf32> to vector<1x128xf32>
    %c0_13 = arith.constant 0 : index
    %c0_14 = arith.constant 0 : index
    %c0_15 = arith.constant 0 : index
    %24 = vector.load %arg6[%c0_13, %c0_14, %c0_15] : memref<1x2x128xf32, #tpu.memory_space<vmem>>, vector<1x1x128xf32>
    %25 = vector.shape_cast %24 : vector<1x1x128xf32> to vector<1x128xf32>
    %26 = vector.shape_cast %23 : vector<1x128xf32> to vector<1x1x128xf32>
    tpu.vector_store %arg6[%c0_13, %c0_14, %c0_15], %26 {strides = array<i32>} : memref<1x2x128xf32, #tpu.memory_space<vmem>>, vector<1x1x128xf32>,
    %27 = arith.mulf %18, %18 : vector<16x128xf32>
    %cst_16 = arith.constant dense<0.000000e+00> : vector<128xf32>
    %28 = vector.multi_reduction <add>, %27, %cst_16 [0] : vector<16x128xf32> to vector<128xf32>
    %29 = vector.shape_cast %28 : vector<128xf32> to vector<1x128xf32>
    %c0_17 = arith.constant 0 : index
    %c1 = arith.constant 1 : index
    %c0_18 = arith.constant 0 : index
    %30 = vector.load %arg6[%c0_17, %c1, %c0_18] : memref<1x2x128xf32, #tpu.memory_space<vmem>>, vector<1x1x128xf32>
    %31 = vector.shape_cast %30 : vector<1x1x128xf32> to vector<1x128xf32>
    %32 = vector.shape_cast %29 : vector<1x128xf32> to vector<1x1x128xf32>
    tpu.vector_store %arg6[%c0_17, %c1, %c0_18], %32 {strides = array<i32>} : memref<1x2x128xf32, #tpu.memory_space<vmem>>, vector<1x1x128xf32>,
    return
  }
  func.func @transform_0(%arg0: i32, %arg1: i32) -> (i32, i32, i32) {
    %c0_i32 = arith.constant 0 : i32
    %c0_i32_0 = arith.constant 0 : i32
    %c0_i32_1 = arith.constant 0 : i32
    return %arg0, %c0_i32, %c0_i32_0 : i32, i32, i32
  }
  func.func @transform_1(%arg0: i32, %arg1: i32) -> (i32, i32, i32) {
    %c0_i32 = arith.constant 0 : i32
    %c0_i32_0 = arith.constant 0 : i32
    return %arg0, %arg1, %c0_i32 : i32, i32, i32
  }
  func.func @transform_2(%arg0: i32, %arg1: i32) -> (i32, i32, i32) {
    %c0_i32 = arith.constant 0 : i32
    %c0_i32_0 = arith.constant 0 : i32
    %c0_i32_1 = arith.constant 0 : i32
    return %arg0, %c0_i32, %c0_i32_0 : i32, i32, i32
  }
  func.func @transform_3(%arg0: i32, %arg1: i32) -> (i32, i32, i32) {
    %c0_i32 = arith.constant 0 : i32
    %c0_i32_0 = arith.constant 0 : i32
    return %arg0, %arg1, %c0_i32 : i32, i32, i32
  }
  func.func @transform_4(%arg0: i32, %arg1: i32) -> (i32, i32, i32) {
    %c1_i32 = arith.constant 1 : i32
    %0 = arith.muli %arg0, %c1_i32 : i32
    %1 = arith.addi %0, %arg1 : i32
    %c0_i32 = arith.constant 0 : i32
    %c0_i32_0 = arith.constant 0 : i32
    %c0_i32_1 = arith.constant 0 : i32
    return %1, %c0_i32, %c0_i32_0 : i32, i32, i32
  }
}

</mosaic_0001>

<llo_original>
// kernel: tpu_custom_call.1
$region0: #{tpu_custom_call.1}
  #allocation0 [shape = 'u32[]', space=smem, size = 0x4, offset = 0x4, fixed_abs, tag = 'smem constant byte address 0x4 - core index']
  #allocation1 [shape = 'u32[144,128]{1,0:T(1,128)}', space=vmem, size = 0x12000, scoped, tag = 'internal scratch']
  %s0 = inlined_call_operand.vmem [shape: f32[2,8,1], index: 0, kind: input, shape index: {}]
  %s1 = inlined_call_operand.vmem [shape: f32[2,16,1], index: 1, kind: input, shape index: {}]
  %s2 = inlined_call_operand.vmem [shape: f32[2,8,128], index: 2, kind: input, shape index: {}]
  %s3 = inlined_call_operand.hbm [shape: f32[2,16,128], index: 3, kind: output, shape index: {0}]
  %s4 = inlined_call_operand.hbm [shape: f32[2,2,128], index: 4, kind: output, shape index: {1}]
  %5 = xla_tuple %s3, %s4
  %s6 = sld [smem:[#allocation0]]
  $region53: #{tpu_custom_call.1} parent=0
    _
  %s8 = ssub.s32 1, %s6
  %s9 = scalar_select 0, %s8, %s6
  $region1: #{tpu_custom_call.1} parent=0
    #allocation2 [shape = 'u8[16384]{0}', space=vmem, size = 0x4000, scoped, tag = 'output window, operand 0']
    #allocation3 [shape = 's32[2]{0}', space=sflag, size = 0x8, scoped, tag = 'scoped memory for tpu_custom_call.1']
    #allocation4 [shape = 'u8[2048]{0}', space=vmem, size = 0x800, scoped, tag = 'output window, operand 1']
    #allocation5 [shape = 's32[2]{0}', space=sflag, size = 0x8, scoped, tag = 'scoped memory for tpu_custom_call.1']
    %10 = vsyncpa [#allocation3], 0
    %s11 = scalar_lea.sflag [#allocation3], 1
    %12 = vsyncpa %s11, 0
    %13 = vsyncpa [#allocation5], 0
    %s14 = scalar_lea.sflag [#allocation5], 1
    %15 = vsyncpa %s14, 0
    loop: start=0, step=1, limit=4
    $region2: #{tpu_custom_call.1} parent=1 // loop_pre_header
      _
    $region3: #{tpu_custom_call.1} parent=1 // loop_header
      %s17 = sphi 0, %s21
      %p18 = scmp.ge.s32.totalorder %s17, 4
      %s24 = sphi 0, %s36
      %s25 = sphi 0, %s32
      %s26 = sphi 0, %s24
      %s27 = sphi 0, %s25
      %s28 = sphi 0, %s26
      %s29 = sphi 0, %s27
      %s39 = sphi 0, %s41
      %s42 = sphi 0, %s39
      %s43 = sphi 0, %s42
      %s59 = sphi 0, %s43
      %s67 = sphi 0, %s69
      %s70 = sphi 0, %s67
      %s71 = sphi 0, %s70
      %s87 = sphi 0, %s71
      %s93 = sphi 0, %s95
      %s96 = sphi 0, %s93
      %s97 = sphi 0, %s96
      %s113 = sphi 0, %s97
      %s121 = sphi 0, %s123
      %s124 = sphi 0, %s121
      %s125 = sphi 0, %s124
      %s141 = sphi 0, %s125
      %s149 = sphi 0, %s151
      %s152 = sphi 0, %s149
      %s153 = sphi 0, %s152
      %s169 = sphi 0, %s153
    $region4: #{tpu_custom_call.1} parent=1 // loop_header_branch
      %20 = sbr.rel (%p18) target = $region8
    $region5: #{tpu_custom_call.1} parent=1 // loop_body
      %s22 = ssub.s32 %s17, 1
      %s23 = ssub.s32 %s17, 2
      %s30 = sadd.s32 1, %s25
      %p31 = scmp.ge.s32.totalorder %s30, 1
      %s32 = scalar_select %p31, 0, %s30
      %s33 = sadd.s32 1, %s24
      %s34 = scalar_select %p31, %s33, %s24
      %p35 = scmp.ge.s32.totalorder %s34, 2
      %s36 = scalar_select %p35, 0, %s34
      %s37 = ssub.s32 %s24, %s36
      %p38 = scmp.eq.s32.totalorder %s37, 0
      %s40 = sadd.s32 %s39, 1
      %s41 = scalar_select %p38, %s39, %s40
      %p44 = pneg %p38
      %p45 = scmp.eq.s32.totalorder %s17, 1
      %p46 = por %p44, %p45
      %p47 = scmp.ne.s32.totalorder %s39, %s42
      %p48 = scmp.eq.s32.totalorder %s17, 0
      %p49 = por %p47, %p48
      %p50 = scmp.ne.s32.totalorder %s39, %s42
      %p51 = scmp.eq.s32.totalorder %s22, 1
      %p52 = por %p50, %p51
      %p53 = scmp.ne.s32.totalorder %s42, %s43
      %p54 = scmp.eq.s32.totalorder %s22, 0
      %p55 = por %p53, %p54
      %p56 = scmp.ne.s32.totalorder %s42, %s43
      %p57 = scmp.eq.s32.totalorder %s23, 1
      %p58 = por %p56, %p57
      %p60 = scmp.ne.s32.totalorder %s43, %s59
      %p61 = scmp.eq.s32.totalorder %s23, 0
      %p62 = por %p60, %p61
      %s63 = ssub.s32 %s24, %s36
      %s64 = ssub.s32 %s25, %s32
      %s65 = sor.u32 %s63, %s64
      %p66 = scmp.eq.s32.totalorder %s65, 0
      %s68 = sadd.s32 %s67, 1
      %s69 = scalar_select %p66, %s67, %s68
      %p72 = pneg %p66
      %p73 = scmp.eq.s32.totalorder %s17, 1
      %p74 = por %p72, %p73
      %p75 = scmp.ne.s32.totalorder %s67, %s70
      %p76 = scmp.eq.s32.totalorder %s17, 0
      %p77 = por %p75, %p76
      %p78 = scmp.ne.s32.totalorder %s67, %s70
      %p79 = scmp.eq.s32.totalorder %s22, 1
      %p80 = por %p78, %p79
      %p81 = scmp.ne.s32.totalorder %s70, %s71
      %p82 = scmp.eq.s32.totalorder %s22, 0
      %p83 = por %p81, %p82
      %p84 = scmp.ne.s32.totalorder %s70, %s71
      %p85 = scmp.eq.s32.totalorder %s23, 1
      %p86 = por %p84, %p85
      %p88 = scmp.ne.s32.totalorder %s71, %s87
      %p89 = scmp.eq.s32.totalorder %s23, 0
      %p90 = por %p88, %p89
      %s91 = ssub.s32 %s24, %s36
      %p92 = scmp.eq.s32.totalorder %s91, 0
      %s94 = sadd.s32 %s93, 1
      %s95 = scalar_select %p92, %s93, %s94
      %p98 = pneg %p92
      %p99 = scmp.eq.s32.totalorder %s17, 1
      %p100 = por %p98, %p99
      %p101 = scmp.ne.s32.totalorder %s93, %s96
      %p102 = scmp.eq.s32.totalorder %s17, 0
      %p103 = por %p101, %p102
      %p104 = scmp.ne.s32.totalorder %s93, %s96
      %p105 = scmp.eq.s32.totalorder %s22, 1
      %p106 = por %p104, %p105
      %p107 = scmp.ne.s32.totalorder %s96, %s97
      %p108 = scmp.eq.s32.totalorder %s22, 0
      %p109 = por %p107, %p108
      %p110 = scmp.ne.s32.totalorder %s96, %s97
      %p111 = scmp.eq.s32.totalorder %s23, 1
      %p112 = por %p110, %p111
      %p114 = scmp.ne.s32.totalorder %s97, %s113
      %p115 = scmp.eq.s32.totalorder %s23, 0
      %p116 = por %p114, %p115
      %s117 = ssub.s32 %s24, %s36
      %s118 = ssub.s32 %s25, %s32
      %s119 = sor.u32 %s117, %s118
      %p120 = scmp.eq.s32.totalorder %s119, 0
      %s122 = sadd.s32 %s121, 1
      %s123 = scalar_select %p120, %s121, %s122
      %p126 = pneg %p120
      %p127 = scmp.eq.s32.totalorder %s17, 1
      %p128 = por %p126, %p127
      %p129 = scmp.ne.s32.totalorder %s121, %s124
      %p130 = scmp.eq.s32.totalorder %s17, 0
      %p131 = por %p129, %p130
      %p132 = scmp.ne.s32.totalorder %s121, %s124
      %p133 = scmp.eq.s32.totalorder %s22, 1
      %p134 = por %p132, %p133
      %p135 = scmp.ne.s32.totalorder %s124, %s125
      %p136 = scmp.eq.s32.totalorder %s22, 0
      %p137 = por %p135, %p136
      %p138 = scmp.ne.s32.totalorder %s124, %s125
      %p139 = scmp.eq.s32.totalorder %s23, 1
      %p140 = por %p138, %p139
      %p142 = scmp.ne.s32.totalorder %s125, %s141
      %p143 = scmp.eq.s32.totalorder %s23, 0
      %p144 = por %p142, %p143
      %s145 = sadd.s32 %s24, %s25
      %s146 = sadd.s32 %s36, %s32
      %s147 = ssub.s32 %s145, %s146
      %p148 = scmp.eq.s32.totalorder %s147, 0
      %s150 = sadd.s32 %s149, 1
      %s151 = scalar_select %p148, %s149, %s150
      %p154 = pneg %p148
      %p155 = scmp.eq.s32.totalorder %s17, 1
      %p156 = por %p154, %p155
      %p157 = scmp.ne.s32.totalorder %s149, %s152
      %p158 = scmp.eq.s32.totalorder %s17, 0
      %p159 = por %p157, %p158
      %p160 = scmp.ne.s32.totalorder %s149, %s152
      %p161 = scmp.eq.s32.totalorder %s22, 1
      %p162 = por %p160, %p161
      %p163 = scmp.ne.s32.totalorder %s152, %s153
      %p164 = scmp.eq.s32.totalorder %s22, 0
      %p165 = por %p163, %p164
      %p166 = scmp.ne.s32.totalorder %s152, %s153
      %p167 = scmp.eq.s32.totalorder %s23, 1
      %p168 = por %p166, %p167
      %p170 = scmp.ne.s32.totalorder %s153, %s169
      %p171 = scmp.eq.s32.totalorder %s23, 0
      %p172 = por %p170, %p171
      %p173 = scmp.le.s32.totalorder 1, %s17
      %p174 = scmp.lt.s32.totalorder %s17, 3
      %p175 = pnand %p173, %p174
      %p176 = pneg %p175
      // Predicated region
      $region9: #{tpu_custom_call.1} parent=5 // pred_check
        _
      $region10: #{tpu_custom_call.1} parent=5 // pred_check_branch
        %178 = sbr.rel (%p175) target = $region12
      $region11: #{tpu_custom_call.1} parent=5 // pred_region
        %s179 = ssub.s32 %s17, 1
      $region12: #{tpu_custom_call.1} parent=5 // pred_fallthru
        _
      %p180 = scmp.lt.s32.totalorder %s17, 2
      // Predicated region
      $region13: #{tpu_custom_call.1} parent=5 // pred_check
        %p181 = pneg %p180
      $region14: #{tpu_custom_call.1} parent=5 // pred_check_branch
        %183 = sbr.rel (%p181) target = $region16
      $region15: #{tpu_custom_call.1} parent=5 // pred_region
        // Predicated region
        $region17: #{tpu_custom_call.1} parent=15 // pred_check
          %p184 = pneg %p49
        $region18: #{tpu_custom_call.1} parent=15 // pred_check_branch
          %186 = sbr.rel (%p184) target = $region20
        $region19: #{tpu_custom_call.1} parent=15 // pred_region
          %p187 = scmp.lt.s32.totalorder %s24, 1
          %s188 = scalar_select %p187, %s24, 1
          %s189 = smul.addr %s188, 8
          %s190 = scalar_lea.vmem %s0, %s189
        $region20: #{tpu_custom_call.1} parent=15 // pred_fallthru
          _
        // Predicated region
        $region21: #{tpu_custom_call.1} parent=15 // pred_check
          %p191 = pneg %p77
        $region22: #{tpu_custom_call.1} parent=15 // pred_check_branch
          %193 = sbr.rel (%p191) target = $region24
        $region23: #{tpu_custom_call.1} parent=15 // pred_region
          %s194 = smul.u32 2, %s25
          %p195 = scmp.lt.s32.totalorder %s24, 1
          %s196 = scalar_select %p195, %s24, 1
          %p197 = scmp.lt.s32.totalorder %s194, 1
          %s198 = scalar_select %p197, %s194, 1
          %s199 = smul.addr %s196, 2
          %s200 = sadd.s32 %s198, %s199
          %s201 = smul.addr %s200, 8
          %s202 = scalar_lea.vmem %s1, %s201
          %s203 = smul.u32 2, %s25
        $region24: #{tpu_custom_call.1} parent=15 // pred_fallthru
          _
        // Predicated region
        $region25: #{tpu_custom_call.1} parent=15 // pred_check
          %p204 = pneg %p103
        $region26: #{tpu_custom_call.1} parent=15 // pred_check_branch
          %206 = sbr.rel (%p204) target = $region28
        $region27: #{tpu_custom_call.1} parent=15 // pred_region
          %p207 = scmp.lt.s32.totalorder %s24, 1
          %s208 = scalar_select %p207, %s24, 1
          %s209 = smul.addr %s208, 8
          %s210 = scalar_lea.vmem %s2, %s209
        $region28: #{tpu_custom_call.1} parent=15 // pred_fallthru
          _
      $region16: #{tpu_custom_call.1} parent=5 // pred_fallthru
        _
      %p211 = scmp.le.s32.totalorder 1, %s17
      %p212 = scmp.lt.s32.totalorder %s17, 3
      %p213 = pnand %p211, %p212
      %p214 = pneg %p213
      // Predicated region
      $region29: #{tpu_custom_call.1} parent=5 // pred_check
        _
      $region30: #{tpu_custom_call.1} parent=5 // pred_check_branch
        %216 = sbr.rel (%p213) target = $region32
      $region31: #{tpu_custom_call.1} parent=5 // pred_region
        %s217 = ssub.s32 %s17, 1
        %p218 = scmp.lt.s32.totalorder %s26, 1
        %s219 = scalar_select %p218, %s26, 1
        %s220 = smul.addr %s219, 8
        %s221 = scalar_lea.vmem %s0, %s220
        %p222 = pneg %p55
        %p223 = pneg %p52
        %s224 = smul.u32 2, %s27
        %p225 = scmp.lt.s32.totalorder %s26, 1
        %s226 = scalar_select %p225, %s26, 1
        %p227 = scmp.lt.s32.totalorder %s224, 1
        %s228 = scalar_select %p227, %s224, 1
        %s229 = smul.addr %s226, 2
        %s230 = sadd.s32 %s228, %s229
        %s231 = smul.addr %s230, 8
        %s232 = scalar_lea.vmem %s1, %s231
        %p233 = pneg %p83
        %p234 = pneg %p80
        %p235 = scmp.lt.s32.totalorder %s26, 1
        %s236 = scalar_select %p235, %s26, 1
        %s237 = smul.addr %s236, 8
        %s238 = scalar_lea.vmem %s2, %s237
        %p239 = pneg %p109
        %p240 = pneg %p106
        %p241 = pneg %p137
        %p242 = pneg %p134
        %s243 = sand.u32 %s124, 1
        %s244 = scalar_lea.sflag [#allocation3], %s243
        %s245 = sand.u32 %s124, 1
        %s246 = smul.addr %s245, 16
        %s247 = scalar_lea.vmem [#allocation2], %s246
        %p248 = pneg %p165
        %p249 = pneg %p162
        %s250 = sand.u32 %s152, 1
        %s251 = scalar_lea.sflag [#allocation5], %s250
        %s252 = sand.u32 %s152, 1
        %s253 = smul.addr %s252, 2
        %s254 = scalar_lea.vmem [#allocation4], %s253
        %p255 = scmp.lt.s32.totalorder %s26, 1
        %s256 = scalar_select %p255, %s26, 1
        %s257 = smul.addr %s256, 8
        %s258 = scalar_lea.vmem %s0, %s257
        %s259 = smul.u32 2, %s27
        %p260 = scmp.lt.s32.totalorder %s26, 1
        %s261 = scalar_select %p260, %s26, 1
        %p262 = scmp.lt.s32.totalorder %s259, 1
        %s263 = scalar_select %p262, %s259, 1
        %s264 = smul.addr %s261, 2
        %s265 = sadd.s32 %s263, %s264
        %s266 = smul.addr %s265, 8
        %s267 = scalar_lea.vmem %s1, %s266
        %s268 = smul.u32 2, %s27
        %p269 = scmp.lt.s32.totalorder %s26, 1
        %s270 = scalar_select %p269, %s26, 1
        %s271 = smul.addr %s270, 8
        %s272 = scalar_lea.vmem %s2, %s271
        %s273 = smul.u32 2, %s27
        %s274 = sadd.s32 %s26, %s27
        %v275 = vld [vmem:[%s258] sm:$0xff]
        %v276 = vld [vmem:[%s267] sm:$0xff]
        %v277 = vld [vmem:[%s267 + $0x8] sm:$0xff]
        %v278 = vld [vmem:[%s272] sm:$0xff]
        %v280 = vcombine.high %v275, %v275
        %v282 = vunpack.c.l.s4 1966171168
        %v283 = vunpack.c.0.s8 %v282
        %v284 = vlaneseq
        %v285 = vshrl.u32 %v284, 7
        %v286 = vsub.s32 %v283, %v285
        %v287 = vrot.slane %v275, %v286
        %v289 = vunpack.c.l.s4 1966171168
        %v290 = vunpack.c.0.s8 %v289
        %v291 = vlaneseq
        %v292 = vshrl.u32 %v291, 7
        %v293 = vsub.s32 %v290, %v292
        %v294 = vrot.slane %v280, %v293
        %v295 = vcombine.high %v287, %v287
        %v296 = vcombine.high %v294, %v294
        %v298 = vunpack.c.l.s4 1966171168
        %v299 = vunpack.c.0.s8 %v298
        %v300 = vlaneseq
        %v301 = vshrl.u32 %v300, 7
        %v302 = vsub.s32 %v299, %v301
        %v303 = vrot.slane %v287, %v302
        %v305 = vunpack.c.l.s4 1966171168
        %v306 = vunpack.c.0.s8 %v305
        %v307 = vlaneseq
        %v308 = vshrl.u32 %v307, 7
        %v309 = vsub.s32 %v306, %v308
        %v310 = vrot.slane %v294, %v309
        %v312 = vunpack.c.l.s4 1966171168
        %v313 = vunpack.c.0.s8 %v312
        %v314 = vlaneseq
        %v315 = vshrl.u32 %v314, 7
        %v316 = vsub.s32 %v313, %v315
        %v317 = vrot.slane %v295, %v316
        %v319 = vunpack.c.l.s4 1966171168
        %v320 = vunpack.c.0.s8 %v319
        %v321 = vlaneseq
        %v322 = vshrl.u32 %v321, 7
        %v323 = vsub.s32 %v320, %v322
        %v324 = vrot.slane %v296, %v323
        %v325 = vcombine.high %v303, %v303
        %v326 = vcombine.high %v310, %v310
        %v327 = vcombine.high %v317, %v317
        %v328 = vcombine.high %v324, %v324
        %v329 = vlaneseq
        %v330 = vshrl.u32 %v329, 7
        %v331 = vsub.s32 0, %v330
        %v332 = vrot.slane %v303, %v331
        %v333 = vlaneseq
        %v334 = vshrl.u32 %v333, 7
        %v335 = vsub.s32 0, %v334
        %v336 = vrot.slane %v317, %v335
        %v337 = vlaneseq
        %v338 = vshrl.u32 %v337, 7
        %v339 = vsub.s32 0, %v338
        %v340 = vrot.slane %v325, %v339
        %v341 = vlaneseq
        %v342 = vshrl.u32 %v341, 7
        %v343 = vsub.s32 0, %v342
        %v344 = vrot.slane %v327, %v343
        %v345 = vlaneseq
        %v346 = vshrl.u32 %v345, 7
        %v347 = vsub.s32 0, %v346
        %v348 = vrot.slane %v310, %v347
        %v349 = vlaneseq
        %v350 = vshrl.u32 %v349, 7
        %v351 = vsub.s32 0, %v350
        %v352 = vrot.slane %v324, %v351
        %v353 = vlaneseq
        %v354 = vshrl.u32 %v353, 7
        %v355 = vsub.s32 0, %v354
        %v356 = vrot.slane %v326, %v355
        %v357 = vlaneseq
        %v358 = vshrl.u32 %v357, 7
        %v359 = vsub.s32 0, %v358
        %v360 = vrot.slane %v328, %v359
        %vm369 = vcmp.eq.f32.partialorder %v332, %v276
        %vm370 = vcmp.eq.f32.partialorder %v332, %v277
        %vm371 = vcmp.eq.f32.partialorder %v336, %v276
        %vm372 = vcmp.eq.f32.partialorder %v336, %v277
        %vm373 = vcmp.eq.f32.partialorder %v340, %v276
        %vm374 = vcmp.eq.f32.partialorder %v340, %v277
        %vm375 = vcmp.eq.f32.partialorder %v344, %v276
        %vm376 = vcmp.eq.f32.partialorder %v344, %v277
        %vm377 = vcmp.eq.f32.partialorder %v348, %v276
        %vm378 = vcmp.eq.f32.partialorder %v348, %v277
        %vm379 = vcmp.eq.f32.partialorder %v352, %v276
        %vm380 = vcmp.eq.f32.partialorder %v352, %v277
        %vm381 = vcmp.eq.f32.partialorder %v356, %v276
        %vm382 = vcmp.eq.f32.partialorder %v356, %v277
        %vm383 = vcmp.eq.f32.partialorder %v360, %v276
        %vm384 = vcmp.eq.f32.partialorder %v360, %v277
        %v386 = vcombine.high %v278, %v278
        %v388 = vunpack.c.l.s4 1966171168
        %v389 = vunpack.c.0.s8 %v388
        %v390 = vlaneseq
        %v391 = vshrl.u32 %v390, 7
        %v392 = vsub.s32 %v389, %v391
        %v393 = vrot.slane %v278, %v392
        %v395 = vunpack.c.l.s4 1966171168
        %v396 = vunpack.c.0.s8 %v395
        %v397 = vlaneseq
        %v398 = vshrl.u32 %v397, 7
        %v399 = vsub.s32 %v396, %v398
        %v400 = vrot.slane %v386, %v399
        %v401 = vcombine.high %v393, %v393
        %v402 = vcombine.high %v400, %v400
        %v404 = vunpack.c.l.s4 1966171168
        %v405 = vunpack.c.0.s8 %v404
        %v406 = vlaneseq
        %v407 = vshrl.u32 %v406, 7
        %v408 = vsub.s32 %v405, %v407
        %v409 = vrot.slane %v393, %v408
        %v411 = vunpack.c.l.s4 1966171168
        %v412 = vunpack.c.0.s8 %v411
        %v413 = vlaneseq
        %v414 = vshrl.u32 %v413, 7
        %v415 = vsub.s32 %v412, %v414
        %v416 = vrot.slane %v400, %v415
        %v418 = vunpack.c.l.s4 1966171168
        %v419 = vunpack.c.0.s8 %v418
        %v420 = vlaneseq
        %v421 = vshrl.u32 %v420, 7
        %v422 = vsub.s32 %v419, %v421
        %v423 = vrot.slane %v401, %v422
        %v425 = vunpack.c.l.s4 1966171168
        %v426 = vunpack.c.0.s8 %v425
        %v427 = vlaneseq
        %v428 = vshrl.u32 %v427, 7
        %v429 = vsub.s32 %v426, %v428
        %v430 = vrot.slane %v402, %v429
        %v431 = vcombine.high %v409, %v409
        %v432 = vcombine.high %v416, %v416
        %v433 = vcombine.high %v423, %v423
        %v434 = vcombine.high %v430, %v430
        %v435 = vsel %vm369, 1, 0
        %v436 = vsel %vm370, 1, 0
        %v437 = vsel %vm371, 1, 0
        %v438 = vsel %vm372, 1, 0
        %v439 = vsel %vm373, 1, 0
        %v440 = vsel %vm374, 1, 0
        %v441 = vsel %vm375, 1, 0
        %v442 = vsel %vm376, 1, 0
        %v443 = vsel %vm377, 1, 0
        %v444 = vsel %vm378, 1, 0
        %v445 = vsel %vm379, 1, 0
        %v446 = vsel %vm380, 1, 0
        %v447 = vsel %vm381, 1, 0
        %v448 = vsel %vm382, 1, 0
        %v449 = vsel %vm383, 1, 0
        %v450 = vsel %vm384, 1, 0
        %451 = vset.pattern.permute.xlu0 0
        %452 = vperm.xlu0 %451, %v435
        %v453 = vpop.permute.xlu0 %452
        %454 = vset.pattern.permute.xlu0 0
        %455 = vperm.xlu0 %454, %v436
        %v456 = vpop.permute.xlu0 %455
        %457 = vset.pattern.permute.xlu0 0
        %458 = vperm.xlu0 %457, %v437
        %v459 = vpop.permute.xlu0 %458
        %460 = vset.pattern.permute.xlu0 0
        %461 = vperm.xlu0 %460, %v438
        %v462 = vpop.permute.xlu0 %461
        %463 = vset.pattern.permute.xlu0 0
        %464 = vperm.xlu0 %463, %v439
        %v465 = vpop.permute.xlu0 %464
        %466 = vset.pattern.permute.xlu0 0
        %467 = vperm.xlu0 %466, %v440
        %v468 = vpop.permute.xlu0 %467
        %469 = vset.pattern.permute.xlu0 0
        %470 = vperm.xlu0 %469, %v441
        %v471 = vpop.permute.xlu0 %470
        %472 = vset.pattern.permute.xlu0 0
        %473 = vperm.xlu0 %472, %v442
        %v474 = vpop.permute.xlu0 %473
        %475 = vset.pattern.permute.xlu0 0
        %476 = vperm.xlu0 %475, %v443
        %v477 = vpop.permute.xlu0 %476
        %478 = vset.pattern.permute.xlu0 0
        %479 = vperm.xlu0 %478, %v444
        %v480 = vpop.permute.xlu0 %479
        %481 = vset.pattern.permute.xlu0 0
        %482 = vperm.xlu0 %481, %v445
        %v483 = vpop.permute.xlu0 %482
        %484 = vset.pattern.permute.xlu0 0
        %485 = vperm.xlu0 %484, %v446
        %v486 = vpop.permute.xlu0 %485
        %487 = vset.pattern.permute.xlu0 0
        %488 = vperm.xlu0 %487, %v447
        %v489 = vpop.permute.xlu0 %488
        %490 = vset.pattern.permute.xlu0 0
        %491 = vperm.xlu0 %490, %v448
        %v492 = vpop.permute.xlu0 %491
        %493 = vset.pattern.permute.xlu0 0
        %494 = vperm.xlu0 %493, %v449
        %v495 = vpop.permute.xlu0 %494
        %496 = vset.pattern.permute.xlu0 0
        %497 = vperm.xlu0 %496, %v450
        %v498 = vpop.permute.xlu0 %497
        %vm499 = vcmp.eq.s32.totalorder %v453, 1
        %vm500 = vcmp.eq.s32.totalorder %v456, 1
        %vm501 = vcmp.eq.s32.totalorder %v459, 1
        %vm502 = vcmp.eq.s32.totalorder %v462, 1
        %vm503 = vcmp.eq.s32.totalorder %v465, 1
        %vm504 = vcmp.eq.s32.totalorder %v468, 1
        %vm505 = vcmp.eq.s32.totalorder %v471, 1
        %vm506 = vcmp.eq.s32.totalorder %v474, 1
        %vm507 = vcmp.eq.s32.totalorder %v477, 1
        %vm508 = vcmp.eq.s32.totalorder %v480, 1
        %vm509 = vcmp.eq.s32.totalorder %v483, 1
        %vm510 = vcmp.eq.s32.totalorder %v486, 1
        %vm511 = vcmp.eq.s32.totalorder %v489, 1
        %vm512 = vcmp.eq.s32.totalorder %v492, 1
        %vm513 = vcmp.eq.s32.totalorder %v495, 1
        %vm514 = vcmp.eq.s32.totalorder %v498, 1
        %v515 = vlaneseq
        %v516 = vshrl.u32 %v515, 7
        %v517 = vsub.s32 0, %v516
        %v518 = vrot.slane %v409, %v517
        %v519 = vlaneseq
        %v520 = vshrl.u32 %v519, 7
        %v521 = vsub.s32 0, %v520
        %v522 = vrot.slane %v423, %v521
        %v523 = vlaneseq
        %v524 = vshrl.u32 %v523, 7
        %v525 = vsub.s32 0, %v524
        %v526 = vrot.slane %v431, %v525
        %v527 = vlaneseq
        %v528 = vshrl.u32 %v527, 7
        %v529 = vsub.s32 0, %v528
        %v530 = vrot.slane %v433, %v529
        %v531 = vlaneseq
        %v532 = vshrl.u32 %v531, 7
        %v533 = vsub.s32 0, %v532
        %v534 = vrot.slane %v416, %v533
        %v535 = vlaneseq
        %v536 = vshrl.u32 %v535, 7
        %v537 = vsub.s32 0, %v536
        %v538 = vrot.slane %v430, %v537
        %v539 = vlaneseq
        %v540 = vshrl.u32 %v539, 7
        %v541 = vsub.s32 0, %v540
        %v542 = vrot.slane %v432, %v541
        %v543 = vlaneseq
        %v544 = vshrl.u32 %v543, 7
        %v545 = vsub.s32 0, %v544
        %v546 = vrot.slane %v434, %v545
        %v555 = vsel %vm499, %v518, 0.0
        %v556 = vsel %vm500, %v518, 0.0
        %v557 = vsel %vm501, %v522, 0.0
        %v558 = vsel %vm502, %v522, 0.0
        %v559 = vsel %vm503, %v526, 0.0
        %v560 = vsel %vm504, %v526, 0.0
        %v561 = vsel %vm505, %v530, 0.0
        %v562 = vsel %vm506, %v530, 0.0
        %v563 = vsel %vm507, %v534, 0.0
        %v564 = vsel %vm508, %v534, 0.0
        %v565 = vsel %vm509, %v538, 0.0
        %v566 = vsel %vm510, %v538, 0.0
        %v567 = vsel %vm511, %v542, 0.0
        %v568 = vsel %vm512, %v542, 0.0
        %v569 = vsel %vm513, %v546, 0.0
        %v570 = vsel %vm514, %v546, 0.0
        %v571 = vmax.f32 %v555, %v559
        %v572 = vmax.f32 %v557, %v561
        %v573 = vmax.f32 %v571, %v563
        %v574 = vmax.f32 %v572, %v565
        %v575 = vmax.f32 %v573, %v567
        %v576 = vmax.f32 %v574, %v569
        %v577 = vmax.f32 %v575, %v576
        %v578 = vmax.f32 %v556, %v560
        %v579 = vmax.f32 %v558, %v562
        %v580 = vmax.f32 %v578, %v564
        %v581 = vmax.f32 %v579, %v566
        %v582 = vmax.f32 %v580, %v568
        %v583 = vmax.f32 %v581, %v570
        %v584 = vmax.f32 %v582, %v583
        %585 = vst [vmem:[%s247] sm:$0xff] %v577
        %586 = vst [vmem:[%s247 + $0x8] sm:$0xff] %v584
        %v587 = vadd.f32 %v577, %v584
        %v588 = vrot.slane %v587, 4
        %v589 = vadd.f32 %v587, %v588
        %v590 = vrot.slane %v589, 2
        %v591 = vadd.f32 %v589, %v590
        %v592 = vrot.slane %v591, 1
        %v593 = vadd.f32 %v591, %v592
        %594 = vst [vmem:[%s254] sm:$0x1] %v593
        %v595 = vmul.f32 %v577, %v577
        %v596 = vmul.f32 %v584, %v584
        %v597 = vadd.f32 %v595, %v596
        %v598 = vrot.slane %v597, 4
        %v599 = vadd.f32 %v597, %v598
        %v600 = vrot.slane %v599, 2
        %v601 = vadd.f32 %v599, %v600
        %v602 = vrot.slane %v601, 1
        %v603 = vadd.f32 %v601, %v602
        %604 = vst [vmem:[%s254 + $0x1] sm:$0x1] %v603
        %s605 = sand.u32 %s124, 1
        %s606 = scalar_lea.sflag [#allocation3], %s605
        %s607 = sand.u32 %s124, 1
        %s608 = smul.addr %s607, 16
        %s609 = scalar_lea.vmem [#allocation2], %s608
        %s610 = sand.u32 %s152, 1
        %s611 = scalar_lea.sflag [#allocation5], %s610
        %s612 = sand.u32 %s152, 1
        %s613 = smul.addr %s612, 2
        %s614 = scalar_lea.vmem [#allocation4], %s613
        // Predicated region
        $region33: #{tpu_custom_call.1} parent=31 // pred_check
          %p615 = pneg %p134
        $region34: #{tpu_custom_call.1} parent=31 // pred_check_branch
          %617 = sbr.rel (%p615) target = $region36
        $region35: #{tpu_custom_call.1} parent=31 // pred_region
          %s618 = smul.u32 2, %s27
          %s620 = ssub.s32 256, 256
          %621 = vsyncadd %s606, %s620
          %s622 = smul.addr %s26, 2
          %s623 = sadd.s32 %s618, %s622
          %s624 = smul.addr %s623, 128
          %s625 = scalar_lea.hbm %s3, %s624
          %s626 = sshll.u32 %s609, 4
          %s627 = int_to_ptr.vmem [resolvable:$true] %s626
          %632 = dma.vmem_to_hbm [thread:$0]  %s627, 256, %s625, %s606, 128, 128, 8
        $region36: #{tpu_custom_call.1} parent=31 // pred_fallthru
          _
        // Predicated region
        $region37: #{tpu_custom_call.1} parent=31 // pred_check
          %p633 = pneg %p162
        $region38: #{tpu_custom_call.1} parent=31 // pred_check_branch
          %635 = sbr.rel (%p633) target = $region40
        $region39: #{tpu_custom_call.1} parent=31 // pred_region
          %s636 = sadd.s32 %s26, %s27
          %s638 = ssub.s32 32, 32
          %639 = vsyncadd %s611, %s638
          %s640 = smul.addr %s636, 32
          %s641 = scalar_lea.hbm %s4, %s640
          %s643 = sshll.u32 %s614, 4
          %s644 = int_to_ptr.vmem [resolvable:$true] %s643
          %646 = dma.vmem_to_hbm [thread:$0]  %s644, 32, %s641, %s611
        $region40: #{tpu_custom_call.1} parent=31 // pred_fallthru
          _
      $region32: #{tpu_custom_call.1} parent=5 // pred_fallthru
        _
      %p647 = scmp.le.s32.totalorder 2, %s17
      // Predicated region
      $region41: #{tpu_custom_call.1} parent=5 // pred_check
        %p648 = pneg %p647
      $region42: #{tpu_custom_call.1} parent=5 // pred_check_branch
        %650 = sbr.rel (%p648) target = $region44
      $region43: #{tpu_custom_call.1} parent=5 // pred_region
        %s651 = ssub.s32 %s17, 2
        // Predicated region
        $region45: #{tpu_custom_call.1} parent=43 // pred_check
          %p652 = pneg %p140
        $region46: #{tpu_custom_call.1} parent=43 // pred_check_branch
          %654 = sbr.rel (%p652) target = $region48
        $region47: #{tpu_custom_call.1} parent=43 // pred_region
          %s655 = sand.u32 %s125, 1
          %s656 = scalar_lea.sflag [#allocation3], %s655
          %s657 = sand.u32 %s125, 1
          %s658 = smul.addr %s657, 16
          %s659 = scalar_lea.vmem [#allocation2], %s658
          %660 = dma.done %s656, 256
        $region48: #{tpu_custom_call.1} parent=43 // pred_fallthru
          _
        // Predicated region
        $region49: #{tpu_custom_call.1} parent=43 // pred_check
          %p661 = pneg %p168
        $region50: #{tpu_custom_call.1} parent=43 // pred_check_branch
          %663 = sbr.rel (%p661) target = $region52
        $region51: #{tpu_custom_call.1} parent=43 // pred_region
          %s664 = sand.u32 %s153, 1
          %s665 = scalar_lea.sflag [#allocation5], %s664
          %s666 = sand.u32 %s153, 1
          %s667 = smul.addr %s666, 2
          %s668 = scalar_lea.vmem [#allocation4], %s667
          %669 = dma.done %s665, 32
        $region52: #{tpu_custom_call.1} parent=43 // pred_fallthru
          _
      $region44: #{tpu_custom_call.1} parent=5 // pred_fallthru
        _
    $region6: #{tpu_custom_call.1} parent=1 // loop_footer
      %s21 = sadd.s32 1, %s17
    $region7: #{tpu_custom_call.1} parent=1 // loop_footer_branch
      %16 = sbr.rel target = $region3
    $region8: #{tpu_custom_call.1} parent=1 // loop_exit
      _
    %670 = vsyncpa [#allocation3], 1
    %s671 = scalar_lea.sflag [#allocation3], 1
    %672 = vsyncpa %s671, 1
    %673 = vsyncpa [#allocation5], 1
    %s674 = scalar_lea.sflag [#allocation5], 1
    %675 = vsyncpa %s674, 1

</llo_original>
